<compile_context>
chip_gen: v6e
topology: v6e:2x2x1
jax: 0.10.0
libtpu: 0.0.40
codegen_flags: <defaults>
</compile_context>

<pallas_src>
import jax
import jax.numpy as jnp
from jax.experimental import pallas as pl
from jax.experimental.pallas import tpu as pltpu


def rnn_fc_kernel(x_ref, h0_ref, w_ih_ref, w_hh_ref, b_ref, w_fc_ref, b_fc_ref,
                  y_ref, hn_ref, xproj_sc, hseq_sc):
    """Whole sequence in one kernel invocation (no time grid)."""
    Bp = h0_ref.shape[0]              # padded batch (multiple of 8 sublanes)
    T = x_ref.shape[0] // Bp          # static

    # Hoisted input projection for all timesteps (off the serial recurrence),
    # with both biases folded in: one (T*Bp, H) x (H, H) MXU matmul.
    xproj_sc[...] = (
        jnp.dot(x_ref[...], w_ih_ref[...], preferred_element_type=jnp.float32)
        + b_ref[...])

    w_hh = w_hh_ref[...]              # hoist weight load out of the loop

    def step(t, h):
        r = pl.multiple_of(t * Bp, Bp)            # sublane-aligned row offset
        pre = xproj_sc[pl.ds(r, Bp), :]           # (Bp, H)
        h_new = jnp.tanh(
            pre + jnp.dot(h, w_hh, preferred_element_type=jnp.float32))
        hseq_sc[pl.ds(r, Bp), :] = h_new
        return h_new

    # T is small and static -> fully unrolled recurrence.
    h_last = jax.lax.fori_loop(0, T, step, h0_ref[...], unroll=True)

    # Final hidden state: written once, after the loop.
    hn_ref[...] = h_last

    # Fused FC head over all timesteps: one (T*Bp, H) x (H, O) matmul + 1 store.
    y_ref[...] = (
        jnp.dot(hseq_sc[...], w_fc_ref[...], preferred_element_type=jnp.float32)
        + b_fc_ref[...])


@jax.jit
def char_rnn_forward(input_ids, h0, params):
    """input_ids: (B, T) int32; h0: (1, B, H); returns (out, h_n).

    out: (B*T, O)   -- matches PyTorch fc(output.contiguous().view(B*T, -1)).
    h_n: (1, B, H)  -- nn.RNN final hidden state.
    """
    emb, w_ih, w_hh, b_ih, b_hh, w_fc, b_fc = params
    B, T = input_ids.shape
    H = emb.shape[1]
    O = w_fc.shape[0]
    Bp = ((B + 7) // 8) * 8           # pad batch to full sublanes

    # --- glue: embedding gather, layout, weight transposes, batch padding ---
    embedded = jnp.take(emb, input_ids, axis=0)          # (B, T, H)
    x_tbh = jnp.transpose(embedded, (1, 0, 2))           # (T, B, H) time-major
    x_pad = jnp.zeros((T, Bp, H), jnp.float32).at[:, :B, :].set(x_tbh)
    x_flat = x_pad.reshape(T * Bp, H)                    # (T*Bp, H)
    h0_pad = jnp.zeros((Bp, H), jnp.float32).at[:B, :].set(h0[0])

    w_ih_t = w_ih.T                                      # (H, H)
    w_hh_t = w_hh.T                                      # (H, H)
    b_all = (b_ih + b_hh).reshape(1, H)                  # (1, H)
    w_fc_t = w_fc.T                                      # (H, O)
    b_fc_2d = b_fc.reshape(1, O)                         # (1, O)

    y_pad, hn_pad = pl.pallas_call(
        rnn_fc_kernel,
        out_shape=(
            jax.ShapeDtypeStruct((T * Bp, O), jnp.float32),
            jax.ShapeDtypeStruct((Bp, H), jnp.float32),
        ),
        # No grid: every operand is a full-array VMEM block (constants are not
        # double-buffered / re-pipelined).
        in_specs=[pl.BlockSpec(memory_space=pltpu.MemorySpace.VMEM)] * 7,
        out_specs=(
            pl.BlockSpec(memory_space=pltpu.MemorySpace.VMEM),
            pl.BlockSpec(memory_space=pltpu.MemorySpace.VMEM),
        ),
        scratch_shapes=[
            pltpu.VMEM((T * Bp, H), jnp.float32),   # hoisted input projection
            pltpu.VMEM((T * Bp, H), jnp.float32),   # collected h_t sequence
        ],
    )(x_flat, h0_pad, w_ih_t, w_hh_t, b_all, w_fc_t, b_fc_2d)

    # glue: drop batch padding, (T, B, O) -> (B, T, O) -> (B*T, O)
    y = y_pad.reshape(T, Bp, O)[:, :B, :]
    out = jnp.transpose(y, (1, 0, 2)).reshape(B * T, O)
    h_n = hn_pad[:B][None]                               # (1, B, H)
    return out, h_n


def reference_forward(input_ids, h0, params):
    """Pure-JAX reference (lax.scan tanh RNN) for correctness checking."""
    emb, w_ih, w_hh, b_ih, b_hh, w_fc, b_fc = params
    H = emb.shape[1]
    embedded = jnp.take(emb, input_ids, axis=0)          # (B, T, H)
    x_tbh = jnp.transpose(embedded, (1, 0, 2))           # (T, B, H)

    def step(h, x_t):
        h_new = jnp.tanh(x_t @ w_ih.T + b_ih + h @ w_hh.T + b_hh)
        return h_new, h_new

    h_n, h_seq = jax.lax.scan(step, h0[0], x_tbh)
    out = jnp.transpose(h_seq, (1, 0, 2)).reshape(-1, H) @ w_fc.T + b_fc
    return out, h_n[None]


if __name__ == "__main__":
    # Small shapes consistent with the module: vocab=16, hidden=32, output=16,
    # batch=2, seq=8, n_layers=1.
    VOCAB, HIDDEN, OUTPUT = 16, 32, 16
    B, T = 2, 8
    N_LAYERS = 1

    key = jax.random.PRNGKey(0)
    k_emb, k_wih, k_whh, k_bih, k_bhh, k_wfc, k_bfc, k_ids = jax.random.split(key, 8)

    scale = 1.0 / jnp.sqrt(HIDDEN)
    params = (
        jax.random.normal(k_emb, (VOCAB, HIDDEN), jnp.float32),                       # embedding
        jax.random.uniform(k_wih, (HIDDEN, HIDDEN), jnp.float32, -scale, scale),      # W_ih
        jax.random.uniform(k_whh, (HIDDEN, HIDDEN), jnp.float32, -scale, scale),      # W_hh
        jax.random.uniform(k_bih, (HIDDEN,), jnp.float32, -scale, scale),             # b_ih
        jax.random.uniform(k_bhh, (HIDDEN,), jnp.float32, -scale, scale),             # b_hh
        jax.random.uniform(k_wfc, (OUTPUT, HIDDEN), jnp.float32, -scale, scale),      # fc weight
        jax.random.uniform(k_bfc, (OUTPUT,), jnp.float32, -scale, scale),             # fc bias
    )

    input_ids = jax.random.randint(k_ids, (B, T), 0, VOCAB, dtype=jnp.int32)
    h0 = jnp.zeros((N_LAYERS, B, HIDDEN), jnp.float32)   # init_hidden

    out, h_n = char_rnn_forward(input_ids, h0, params)
    jax.block_until_ready((out, h_n))

    out_ref, h_n_ref = reference_forward(input_ids, h0, params)
    assert out.shape == (B * T, OUTPUT)
    assert h_n.shape == (N_LAYERS, B, HIDDEN)
    assert jnp.allclose(out, out_ref, atol=2e-5), "output mismatch vs reference"
    assert jnp.allclose(h_n, h_n_ref, atol=2e-5), "h_n mismatch vs reference"

    print("KERNEL_OK")
</pallas_src>

<mosaic_0001>
module attributes {stable_mosaic.version = 11 : i64} {
  func.func @rnn_fc_kernel(%arg0: memref<64x32xf32, #tpu.memory_space<vmem>>, %arg1: memref<8x32xf32, #tpu.memory_space<vmem>>, %arg2: memref<32x32xf32, #tpu.memory_space<vmem>>, %arg3: memref<32x32xf32, #tpu.memory_space<vmem>>, %arg4: memref<1x32xf32, #tpu.memory_space<vmem>>, %arg5: memref<32x16xf32, #tpu.memory_space<vmem>>, %arg6: memref<1x16xf32, #tpu.memory_space<vmem>>, %arg7: memref<64x16xf32, #tpu.memory_space<vmem>>, %arg8: memref<8x32xf32, #tpu.memory_space<vmem>>, %arg9: memref<64x32xf32, #tpu.memory_space<vmem>>, %arg10: memref<64x32xf32, #tpu.memory_space<vmem>>) attributes {dimension_semantics = [], scalar_prefetch = 0 : i64, scratch_operands = 2 : i64, tpu.core_type = #tpu.core_type<tc>} {
    %c0 = arith.constant 0 : index
    %c0_0 = arith.constant 0 : index
    %0 = vector.load %arg0[%c0, %c0_0] : memref<64x32xf32, #tpu.memory_space<vmem>>, vector<64x32xf32>
    %c0_1 = arith.constant 0 : index
    %c0_2 = arith.constant 0 : index
    %1 = vector.load %arg2[%c0_1, %c0_2] : memref<32x32xf32, #tpu.memory_space<vmem>>, vector<32x32xf32>
    %cst = arith.constant dense<0.000000e+00> : vector<64x32xf32>
    %2 = tpu.matmul %0, %1, %cst {dimension_numbers = #tpu.dot_dimension_numbers<[1], [0], [0], [1], [0, 0, 1, 1], [], []>} : vector<64x32xf32>, vector<32x32xf32>, vector<64x32xf32> -> vector<64x32xf32>
    %c0_3 = arith.constant 0 : index
    %c0_4 = arith.constant 0 : index
    %3 = vector.load %arg4[%c0_3, %c0_4] : memref<1x32xf32, #tpu.memory_space<vmem>>, vector<1x32xf32>
    %4 = vector.broadcast %3 : vector<1x32xf32> to vector<64x32xf32>
    %5 = arith.addf %2, %4 : vector<64x32xf32>
    %c0_5 = arith.constant 0 : index
    %c0_6 = arith.constant 0 : index
    %6 = vector.load %arg9[%c0_5, %c0_6] : memref<64x32xf32, #tpu.memory_space<vmem>>, vector<64x32xf32>
    tpu.vector_store %arg9[%c0_5, %c0_6], %5 {strides = array<i32>} : memref<64x32xf32, #tpu.memory_space<vmem>>, vector<64x32xf32>,
    %c0_7 = arith.constant 0 : index
    %c0_8 = arith.constant 0 : index
    %7 = vector.load %arg3[%c0_7, %c0_8] : memref<32x32xf32, #tpu.memory_space<vmem>>, vector<32x32xf32>
    %c0_9 = arith.constant 0 : index
    %c0_10 = arith.constant 0 : index
    %8 = vector.load %arg1[%c0_9, %c0_10] : memref<8x32xf32, #tpu.memory_space<vmem>>, vector<8x32xf32>
    %c0_i32 = arith.constant 0 : i32
    %c8_i32 = arith.constant 8 : i32
    %9 = arith.muli %c0_i32, %c8_i32 : i32
    %10 = tpu.assume_multiple %9, 8 : i32
    %11 = arith.index_cast %10 : i32 to index
    %c0_11 = arith.constant 0 : index
    %12 = vector.load %arg9[%11, %c0_11] : memref<64x32xf32, #tpu.memory_space<vmem>>, vector<8x32xf32>
    %cst_12 = arith.constant dense<0.000000e+00> : vector<8x32xf32>
    %13 = tpu.matmul %8, %7, %cst_12 {dimension_numbers = #tpu.dot_dimension_numbers<[1], [0], [0], [1], [0, 0, 1, 1], [], []>} : vector<8x32xf32>, vector<32x32xf32>, vector<8x32xf32> -> vector<8x32xf32>
    %14 = arith.addf %12, %13 : vector<8x32xf32>
    %15 = math.tanh %14 : vector<8x32xf32>
    %16 = arith.index_cast %10 : i32 to index
    %c0_13 = arith.constant 0 : index
    %17 = vector.load %arg10[%16, %c0_13] : memref<64x32xf32, #tpu.memory_space<vmem>>, vector<8x32xf32>
    tpu.vector_store %arg10[%16, %c0_13], %15 {strides = array<i32>} : memref<64x32xf32, #tpu.memory_space<vmem>>, vector<8x32xf32>,
    %c1_i32 = arith.constant 1 : i32
    %c8_i32_14 = arith.constant 8 : i32
    %18 = arith.muli %c1_i32, %c8_i32_14 : i32
    %19 = tpu.assume_multiple %18, 8 : i32
    %20 = arith.index_cast %19 : i32 to index
    %c0_15 = arith.constant 0 : index
    %21 = vector.load %arg9[%20, %c0_15] : memref<64x32xf32, #tpu.memory_space<vmem>>, vector<8x32xf32>
    %cst_16 = arith.constant dense<0.000000e+00> : vector<8x32xf32>
    %22 = tpu.matmul %15, %7, %cst_16 {dimension_numbers = #tpu.dot_dimension_numbers<[1], [0], [0], [1], [0, 0, 1, 1], [], []>} : vector<8x32xf32>, vector<32x32xf32>, vector<8x32xf32> -> vector<8x32xf32>
    %23 = arith.addf %21, %22 : vector<8x32xf32>
    %24 = math.tanh %23 : vector<8x32xf32>
    %25 = arith.index_cast %19 : i32 to index
    %c0_17 = arith.constant 0 : index
    %26 = vector.load %arg10[%25, %c0_17] : memref<64x32xf32, #tpu.memory_space<vmem>>, vector<8x32xf32>
    tpu.vector_store %arg10[%25, %c0_17], %24 {strides = array<i32>} : memref<64x32xf32, #tpu.memory_space<vmem>>, vector<8x32xf32>,
    %c2_i32 = arith.constant 2 : i32
    %c8_i32_18 = arith.constant 8 : i32
    %27 = arith.muli %c2_i32, %c8_i32_18 : i32
    %28 = tpu.assume_multiple %27, 8 : i32
    %29 = arith.index_cast %28 : i32 to index
    %c0_19 = arith.constant 0 : index
    %30 = vector.load %arg9[%29, %c0_19] : memref<64x32xf32, #tpu.memory_space<vmem>>, vector<8x32xf32>
    %cst_20 = arith.constant dense<0.000000e+00> : vector<8x32xf32>
    %31 = tpu.matmul %24, %7, %cst_20 {dimension_numbers = #tpu.dot_dimension_numbers<[1], [0], [0], [1], [0, 0, 1, 1], [], []>} : vector<8x32xf32>, vector<32x32xf32>, vector<8x32xf32> -> vector<8x32xf32>
    %32 = arith.addf %30, %31 : vector<8x32xf32>
    %33 = math.tanh %32 : vector<8x32xf32>
    %34 = arith.index_cast %28 : i32 to index
    %c0_21 = arith.constant 0 : index
    %35 = vector.load %arg10[%34, %c0_21] : memref<64x32xf32, #tpu.memory_space<vmem>>, vector<8x32xf32>
    tpu.vector_store %arg10[%34, %c0_21], %33 {strides = array<i32>} : memref<64x32xf32, #tpu.memory_space<vmem>>, vector<8x32xf32>,
    %c3_i32 = arith.constant 3 : i32
    %c8_i32_22 = arith.constant 8 : i32
    %36 = arith.muli %c3_i32, %c8_i32_22 : i32
    %37 = tpu.assume_multiple %36, 8 : i32
    %38 = arith.index_cast %37 : i32 to index
    %c0_23 = arith.constant 0 : index
    %39 = vector.load %arg9[%38, %c0_23] : memref<64x32xf32, #tpu.memory_space<vmem>>, vector<8x32xf32>
    %cst_24 = arith.constant dense<0.000000e+00> : vector<8x32xf32>
    %40 = tpu.matmul %33, %7, %cst_24 {dimension_numbers = #tpu.dot_dimension_numbers<[1], [0], [0], [1], [0, 0, 1, 1], [], []>} : vector<8x32xf32>, vector<32x32xf32>, vector<8x32xf32> -> vector<8x32xf32>
    %41 = arith.addf %39, %40 : vector<8x32xf32>
    %42 = math.tanh %41 : vector<8x32xf32>
    %43 = arith.index_cast %37 : i32 to index
    %c0_25 = arith.constant 0 : index
    %44 = vector.load %arg10[%43, %c0_25] : memref<64x32xf32, #tpu.memory_space<vmem>>, vector<8x32xf32>
    tpu.vector_store %arg10[%43, %c0_25], %42 {strides = array<i32>} : memref<64x32xf32, #tpu.memory_space<vmem>>, vector<8x32xf32>,
    %c4_i32 = arith.constant 4 : i32
    %c8_i32_26 = arith.constant 8 : i32
    %45 = arith.muli %c4_i32, %c8_i32_26 : i32
    %46 = tpu.assume_multiple %45, 8 : i32
    %47 = arith.index_cast %46 : i32 to index
    %c0_27 = arith.constant 0 : index
    %48 = vector.load %arg9[%47, %c0_27] : memref<64x32xf32, #tpu.memory_space<vmem>>, vector<8x32xf32>
    %cst_28 = arith.constant dense<0.000000e+00> : vector<8x32xf32>
    %49 = tpu.matmul %42, %7, %cst_28 {dimension_numbers = #tpu.dot_dimension_numbers<[1], [0], [0], [1], [0, 0, 1, 1], [], []>} : vector<8x32xf32>, vector<32x32xf32>, vector<8x32xf32> -> vector<8x32xf32>
    %50 = arith.addf %48, %49 : vector<8x32xf32>
    %51 = math.tanh %50 : vector<8x32xf32>
    %52 = arith.index_cast %46 : i32 to index
    %c0_29 = arith.constant 0 : index
    %53 = vector.load %arg10[%52, %c0_29] : memref<64x32xf32, #tpu.memory_space<vmem>>, vector<8x32xf32>
    tpu.vector_store %arg10[%52, %c0_29], %51 {strides = array<i32>} : memref<64x32xf32, #tpu.memory_space<vmem>>, vector<8x32xf32>,
    %c5_i32 = arith.constant 5 : i32
    %c8_i32_30 = arith.constant 8 : i32
    %54 = arith.muli %c5_i32, %c8_i32_30 : i32
    %55 = tpu.assume_multiple %54, 8 : i32
    %56 = arith.index_cast %55 : i32 to index
    %c0_31 = arith.constant 0 : index
    %57 = vector.load %arg9[%56, %c0_31] : memref<64x32xf32, #tpu.memory_space<vmem>>, vector<8x32xf32>
    %cst_32 = arith.constant dense<0.000000e+00> : vector<8x32xf32>
    %58 = tpu.matmul %51, %7, %cst_32 {dimension_numbers = #tpu.dot_dimension_numbers<[1], [0], [0], [1], [0, 0, 1, 1], [], []>} : vector<8x32xf32>, vector<32x32xf32>, vector<8x32xf32> -> vector<8x32xf32>
    %59 = arith.addf %57, %58 : vector<8x32xf32>
    %60 = math.tanh %59 : vector<8x32xf32>
    %61 = arith.index_cast %55 : i32 to index
    %c0_33 = arith.constant 0 : index
    %62 = vector.load %arg10[%61, %c0_33] : memref<64x32xf32, #tpu.memory_space<vmem>>, vector<8x32xf32>
    tpu.vector_store %arg10[%61, %c0_33], %60 {strides = array<i32>} : memref<64x32xf32, #tpu.memory_space<vmem>>, vector<8x32xf32>,
    %c6_i32 = arith.constant 6 : i32
    %c8_i32_34 = arith.constant 8 : i32
    %63 = arith.muli %c6_i32, %c8_i32_34 : i32
    %64 = tpu.assume_multiple %63, 8 : i32
    %65 = arith.index_cast %64 : i32 to index
    %c0_35 = arith.constant 0 : index
    %66 = vector.load %arg9[%65, %c0_35] : memref<64x32xf32, #tpu.memory_space<vmem>>, vector<8x32xf32>
    %cst_36 = arith.constant dense<0.000000e+00> : vector<8x32xf32>
    %67 = tpu.matmul %60, %7, %cst_36 {dimension_numbers = #tpu.dot_dimension_numbers<[1], [0], [0], [1], [0, 0, 1, 1], [], []>} : vector<8x32xf32>, vector<32x32xf32>, vector<8x32xf32> -> vector<8x32xf32>
    %68 = arith.addf %66, %67 : vector<8x32xf32>
    %69 = math.tanh %68 : vector<8x32xf32>
    %70 = arith.index_cast %64 : i32 to index
    %c0_37 = arith.constant 0 : index
    %71 = vector.load %arg10[%70, %c0_37] : memref<64x32xf32, #tpu.memory_space<vmem>>, vector<8x32xf32>
    tpu.vector_store %arg10[%70, %c0_37], %69 {strides = array<i32>} : memref<64x32xf32, #tpu.memory_space<vmem>>, vector<8x32xf32>,
    %c7_i32 = arith.constant 7 : i32
    %c8_i32_38 = arith.constant 8 : i32
    %72 = arith.muli %c7_i32, %c8_i32_38 : i32
    %73 = tpu.assume_multiple %72, 8 : i32
    %74 = arith.index_cast %73 : i32 to index
    %c0_39 = arith.constant 0 : index
    %75 = vector.load %arg9[%74, %c0_39] : memref<64x32xf32, #tpu.memory_space<vmem>>, vector<8x32xf32>
    %cst_40 = arith.constant dense<0.000000e+00> : vector<8x32xf32>
    %76 = tpu.matmul %69, %7, %cst_40 {dimension_numbers = #tpu.dot_dimension_numbers<[1], [0], [0], [1], [0, 0, 1, 1], [], []>} : vector<8x32xf32>, vector<32x32xf32>, vector<8x32xf32> -> vector<8x32xf32>
    %77 = arith.addf %75, %76 : vector<8x32xf32>
    %78 = math.tanh %77 : vector<8x32xf32>
    %79 = arith.index_cast %73 : i32 to index
    %c0_41 = arith.constant 0 : index
    %80 = vector.load %arg10[%79, %c0_41] : memref<64x32xf32, #tpu.memory_space<vmem>>, vector<8x32xf32>
    tpu.vector_store %arg10[%79, %c0_41], %78 {strides = array<i32>} : memref<64x32xf32, #tpu.memory_space<vmem>>, vector<8x32xf32>,
    %c8_i32_42 = arith.constant 8 : i32
    %c0_43 = arith.constant 0 : index
    %c0_44 = arith.constant 0 : index
    %81 = vector.load %arg8[%c0_43, %c0_44] : memref<8x32xf32, #tpu.memory_space<vmem>>, vector<8x32xf32>
    tpu.vector_store %arg8[%c0_43, %c0_44], %78 {strides = array<i32>} : memref<8x32xf32, #tpu.memory_space<vmem>>, vector<8x32xf32>,
    %c0_45 = arith.constant 0 : index
    %c0_46 = arith.constant 0 : index
    %82 = vector.load %arg10[%c0_45, %c0_46] : memref<64x32xf32, #tpu.memory_space<vmem>>, vector<64x32xf32>
    %c0_47 = arith.constant 0 : index
    %c0_48 = arith.constant 0 : index
    %83 = vector.load %arg5[%c0_47, %c0_48] : memref<32x16xf32, #tpu.memory_space<vmem>>, vector<32x16xf32>
    %cst_49 = arith.constant dense<0.000000e+00> : vector<64x16xf32>
    %84 = tpu.matmul %82, %83, %cst_49 {dimension_numbers = #tpu.dot_dimension_numbers<[1], [0], [0], [1], [0, 0, 1, 1], [], []>} : vector<64x32xf32>, vector<32x16xf32>, vector<64x16xf32> -> vector<64x16xf32>
    %c0_50 = arith.constant 0 : index
    %c0_51 = arith.constant 0 : index
    %85 = vector.load %arg6[%c0_50, %c0_51] : memref<1x16xf32, #tpu.memory_space<vmem>>, vector<1x16xf32>
    %86 = vector.broadcast %85 : vector<1x16xf32> to vector<64x16xf32>
    %87 = arith.addf %84, %86 : vector<64x16xf32>
    %c0_52 = arith.constant 0 : index
    %c0_53 = arith.constant 0 : index
    %88 = vector.load %arg7[%c0_52, %c0_53] : memref<64x16xf32, #tpu.memory_space<vmem>>, vector<64x16xf32>
    tpu.vector_store %arg7[%c0_52, %c0_53], %87 {strides = array<i32>} : memref<64x16xf32, #tpu.memory_space<vmem>>, vector<64x16xf32>,
    return
  }
}

</mosaic_0001>

<llo_original>
// kernel: char_rnn_forward.1
$region0: #{char_rnn_forward.1}
  #allocation0 [shape = 'u32[]', space=smem, size = 0x4, offset = 0x4, fixed_abs, tag = 'smem constant byte address 0x4 - core index']
  #allocation1 [shape = 'u32[144,128]{1,0:T(1,128)}', space=vmem, size = 0x12000, scoped, tag = 'internal scratch']
  #allocation2 [shape = 'f32[64,32]{1,0:T(8,128)}', space=vmem, size = 0x8000, scoped, tag = 'scratch operand']
  #allocation3 [shape = 'f32[64,32]{1,0:T(8,128)}', space=vmem, size = 0x8000, scoped, tag = 'scratch operand']
  %s0 = inlined_call_operand.vmem [shape: f32[64,32], index: 0, kind: input, shape index: {}]
  %s1 = inlined_call_operand.vmem [shape: f32[8,32], index: 1, kind: input, shape index: {}]
  %s2 = inlined_call_operand.vmem [shape: f32[32,32], index: 2, kind: input, shape index: {}]
  %s3 = inlined_call_operand.vmem [shape: f32[32,32], index: 3, kind: input, shape index: {}]
  %s4 = inlined_call_operand.vmem [shape: f32[1,32], index: 4, kind: input, shape index: {}]
  %s5 = inlined_call_operand.vmem [shape: f32[32,16], index: 5, kind: input, shape index: {}]
  %s6 = inlined_call_operand.vmem [shape: f32[1,16], index: 6, kind: input, shape index: {}]
  %s7 = inlined_call_operand.vmem [shape: f32[64,16], index: 7, kind: output, shape index: {0}]
  %s8 = inlined_call_operand.vmem [shape: f32[8,32], index: 8, kind: output, shape index: {1}]
  %9 = xla_tuple %s7, %s8
  %s10 = sld [smem:[#allocation0]]
  $region46: #{char_rnn_forward.1} parent=0
    _
  %s12 = ssub.s32 1, %s10
  %s13 = scalar_select 0, %s12, %s10
  // Predicated region
  $region2: #{char_rnn_forward.1} parent=0 // pred_check
    _
  $region3: #{char_rnn_forward.1} parent=0 // pred_check_branch
    %15 = sbr.rel (0) target = $region5
  $region4: #{char_rnn_forward.1} parent=0 // pred_region
    _
  $region5: #{char_rnn_forward.1} parent=0 // pred_fallthru
    _
  // Predicated region
  $region6: #{char_rnn_forward.1} parent=0 // pred_check
    _
  $region7: #{char_rnn_forward.1} parent=0 // pred_check_branch
    %17 = sbr.rel (0) target = $region9
  $region8: #{char_rnn_forward.1} parent=0 // pred_region
    _
  $region9: #{char_rnn_forward.1} parent=0 // pred_fallthru
    _
  // Predicated region
  $region10: #{char_rnn_forward.1} parent=0 // pred_check
    _
  $region11: #{char_rnn_forward.1} parent=0 // pred_check_branch
    %19 = sbr.rel (0) target = $region13
  $region12: #{char_rnn_forward.1} parent=0 // pred_region
    _
  $region13: #{char_rnn_forward.1} parent=0 // pred_fallthru
    _
  // Predicated region
  $region14: #{char_rnn_forward.1} parent=0 // pred_check
    _
  $region15: #{char_rnn_forward.1} parent=0 // pred_check_branch
    %21 = sbr.rel (0) target = $region17
  $region16: #{char_rnn_forward.1} parent=0 // pred_region
    _
  $region17: #{char_rnn_forward.1} parent=0 // pred_fallthru
    _
  // Predicated region
  $region18: #{char_rnn_forward.1} parent=0 // pred_check
    _
  $region19: #{char_rnn_forward.1} parent=0 // pred_check_branch
    %23 = sbr.rel (0) target = $region21
  $region20: #{char_rnn_forward.1} parent=0 // pred_region
    _
  $region21: #{char_rnn_forward.1} parent=0 // pred_fallthru
    _
  // Predicated region
  $region22: #{char_rnn_forward.1} parent=0 // pred_check
    _
  $region23: #{char_rnn_forward.1} parent=0 // pred_check_branch
    %25 = sbr.rel (0) target = $region25
  $region24: #{char_rnn_forward.1} parent=0 // pred_region
    _
  $region25: #{char_rnn_forward.1} parent=0 // pred_fallthru
    _
  // Predicated region
  $region26: #{char_rnn_forward.1} parent=0 // pred_check
    _
  $region27: #{char_rnn_forward.1} parent=0 // pred_check_branch
    %27 = sbr.rel (0) target = $region29
  $region28: #{char_rnn_forward.1} parent=0 // pred_region
    _
  $region29: #{char_rnn_forward.1} parent=0 // pred_fallthru
    _
  %v28 = vld [vmem:[%s0] sm:$0xff]
  %v29 = vld [vmem:[%s0 + $0x8] sm:$0xff]
  %v30 = vld [vmem:[%s0 + $0x10] sm:$0xff]
  %v31 = vld [vmem:[%s0 + $0x18] sm:$0xff]
  %v32 = vld [vmem:[%s0 + $0x20] sm:$0xff]
  %v33 = vld [vmem:[%s0 + $0x28] sm:$0xff]
  %v34 = vld [vmem:[%s0 + $0x30] sm:$0xff]
  %v35 = vld [vmem:[%s0 + $0x38] sm:$0xff]
  %v36 = vld [vmem:[%s2] sm:$0xff]
  %v37 = vld [vmem:[%s2 + $0x8] sm:$0xff]
  %v38 = vld [vmem:[%s2 + $0x10] sm:$0xff]
  %v39 = vld [vmem:[%s2 + $0x18] sm:$0xff]
  %v40 = vld [vmem:[%s4] sm:$0x1]
  %v42 = vlaneseq
  %v43 = vshrl.u32 %v42, 7
  %v44 = vsub.s32 0, %v43
  %v45 = vrot.slane %v40, %v44
  %vm47 = vcmask 261120
  %v49 = vsel %vm47, %v28, 0
  %v52 = vsel %vm47, %v29, 0
  %v55 = vsel %vm47, %v30, 0
  %v58 = vsel %vm47, %v31, 0
  %v61 = vsel %vm47, %v32, 0
  %v64 = vsel %vm47, %v33, 0
  %v67 = vsel %vm47, %v34, 0
  %v70 = vsel %vm47, %v35, 0
  %72 = vmatprep.subr.mxu0 0.0
  %73 = vmatpush1.msra.mxu0 0.0
  %74 = vmatprep.subr.mxu0 0.0
  %75 = vmatpush1.msra.mxu0 0.0
  %76 = vmatprep.subr.mxu0 0.0
  %77 = vmatpush1.msra.mxu0 0.0
  %78 = vmatprep.subr.mxu0 0.0
  %79 = vmatpush1.msra.mxu0 0.0
  %80 = vmatprep.subr.mxu0 0.0
  %81 = vmatpush1.msra.mxu0 0.0
  %82 = vmatprep.subr.mxu0 0.0
  %83 = vmatpush1.msra.mxu0 0.0
  %84 = vmatprep.subr.mxu0 0.0
  %85 = vmatpush1.msra.mxu0 0.0
  %86 = vmatprep.subr.mxu0 0.0
  %87 = vmatpush1.msra.mxu0 0.0
  %88 = vmatprep.subr.mxu0 0.0
  %89 = vmatpush1.msra.mxu0 0.0
  %90 = vmatprep.subr.mxu0 0.0
  %91 = vmatpush1.msra.mxu0 0.0
  %92 = vmatprep.subr.mxu0 0.0
  %93 = vmatpush1.msra.mxu0 0.0
  %94 = vmatprep.subr.mxu0 0.0
  %95 = vmatpush1.msra.mxu0 0.0
  %96 = vmatprep.subr.mxu0 0.0
  %97 = vmatpush1.msra.mxu0 %v39
  %98 = vmatprep.subr.mxu0 0.0
  %99 = vmatpush1.msra.mxu0 %v38
  %100 = vmatprep.subr.mxu0 0.0
  %101 = vmatpush1.msra.mxu0 %v37
  %102 = vmatprep.subr.mxu0 0.0
  %103 = vmatpush1.msra.mxu0 %v36
  %104 = vmatprep.subr.mxu0 0.0
  %105 = vmatpush2.msra.mxu0 0.0
  %106 = vmatprep.subr.mxu0 0.0
  %107 = vmatpush2.msra.mxu0 0.0
  %108 = vmatprep.subr.mxu0 0.0
  %109 = vmatpush2.msra.mxu0 0.0
  %110 = vmatprep.subr.mxu0 0.0
  %111 = vmatpush2.msra.mxu0 0.0
  %112 = vmatprep.subr.mxu0 0.0
  %113 = vmatpush2.msra.mxu0 0.0
  %114 = vmatprep.subr.mxu0 0.0
  %115 = vmatpush2.msra.mxu0 0.0
  %116 = vmatprep.subr.mxu0 0.0
  %117 = vmatpush2.msra.mxu0 0.0
  %118 = vmatprep.subr.mxu0 0.0
  %119 = vmatpush2.msra.mxu0 0.0
  %120 = vmatprep.subr.mxu0 0.0
  %121 = vmatpush2.msra.mxu0 0.0
  %122 = vmatprep.subr.mxu0 0.0
  %123 = vmatpush2.msra.mxu0 0.0
  %124 = vmatprep.subr.mxu0 0.0
  %125 = vmatpush2.msra.mxu0 0.0
  %126 = vmatprep.subr.mxu0 0.0
  %127 = vmatpush2.msra.mxu0 0.0
  %128 = vmatprep.subr.mxu0 0.0
  %129 = vmatpush2.msra.mxu0 0.0
  %130 = vmatprep.subr.mxu0 0.0
  %131 = vmatpush2.msra.mxu0 0.0
  %132 = vmatprep.subr.mxu0 0.0
  %133 = vmatpush2.msra.mxu0 0.0
  %134 = vmatprep.subr.mxu0 0.0
  %135 = vmatpush2.msra.mxu0 0.0
  %136 = vmatprep.mubr.f32.mxu0 0.0
  %137 = vmatmul.mubr.f32.gmra.mxu0 %v49
  %v138 = vpop.f32.mrf.mxu0
  %v139 = vadd.f32 %v45, %v138
  %v140 = vpop.f32.mrf.mxu0
  %141 = vmatprep.mubr.f32.mxu0 0.0
  %142 = vmatmul.mubr.f32.gmra.mxu0 %v52
  %v143 = vpop.f32.mrf.mxu0
  %v144 = vadd.f32 %v45, %v143
  %v145 = vpop.f32.mrf.mxu0
  %146 = vmatprep.mubr.f32.mxu0 0.0
  %147 = vmatmul.mubr.f32.gmra.mxu0 %v55
  %v148 = vpop.f32.mrf.mxu0
  %v149 = vadd.f32 %v45, %v148
  %v150 = vpop.f32.mrf.mxu0
  %151 = vmatprep.mubr.f32.mxu0 0.0
  %152 = vmatmul.mubr.f32.gmra.mxu0 %v58
  %v153 = vpop.f32.mrf.mxu0
  %v154 = vadd.f32 %v45, %v153
  %v155 = vpop.f32.mrf.mxu0
  %156 = vmatprep.mubr.f32.mxu0 0.0
  %157 = vmatmul.mubr.f32.gmra.mxu0 %v61
  %v158 = vpop.f32.mrf.mxu0
  %v159 = vadd.f32 %v45, %v158
  %v160 = vpop.f32.mrf.mxu0
  %161 = vmatprep.mubr.f32.mxu0 0.0
  %162 = vmatmul.mubr.f32.gmra.mxu0 %v64
  %v163 = vpop.f32.mrf.mxu0
  %v164 = vadd.f32 %v45, %v163
  %v165 = vpop.f32.mrf.mxu0
  %166 = vmatprep.mubr.f32.mxu0 0.0
  %167 = vmatmul.mubr.f32.gmra.mxu0 %v67
  %v168 = vpop.f32.mrf.mxu0
  %v169 = vadd.f32 %v45, %v168
  %v170 = vpop.f32.mrf.mxu0
  %171 = vmatprep.mubr.f32.mxu0 0.0
  %172 = vmatmul.mubr.f32.gmra.mxu0 %v70
  %v173 = vpop.f32.mrf.mxu0
  %v174 = vadd.f32 %v45, %v173
  %v175 = vpop.f32.mrf.mxu0
  %176 = vdwg.mxu0
  %177 = vst.msk [vmem:[#allocation2] sm:$0xff] %vm47, %v139
  %178 = vst.msk [vmem:[#allocation2 + $0x8] sm:$0xff] %vm47, %v144
  %179 = vst.msk [vmem:[#allocation2 + $0x10] sm:$0xff] %vm47, %v149
  %180 = vst.msk [vmem:[#allocation2 + $0x18] sm:$0xff] %vm47, %v154
  %181 = vst.msk [vmem:[#allocation2 + $0x20] sm:$0xff] %vm47, %v159
  %182 = vst.msk [vmem:[#allocation2 + $0x28] sm:$0xff] %vm47, %v164
  %183 = vst.msk [vmem:[#allocation2 + $0x30] sm:$0xff] %vm47, %v169
  %184 = vst.msk [vmem:[#allocation2 + $0x38] sm:$0xff] %vm47, %v174
  %v185 = vld [vmem:[%s3] sm:$0xff]
  %v186 = vld [vmem:[%s3 + $0x8] sm:$0xff]
  %v187 = vld [vmem:[%s3 + $0x10] sm:$0xff]
  %v188 = vld [vmem:[%s3 + $0x18] sm:$0xff]
  %v189 = vld [vmem:[%s1] sm:$0xff]
  %v190 = vld [vmem:[#allocation2] sm:$0xff]
  %v192 = vsel %vm47, %v189, 0
  %194 = vmatprep.subr.mxu0 0.0
  %195 = vmatpush1.msra.mxu0 0.0
  %196 = vmatprep.subr.mxu0 0.0
  %197 = vmatpush1.msra.mxu0 0.0
  %198 = vmatprep.subr.mxu0 0.0
  %199 = vmatpush1.msra.mxu0 0.0
  %200 = vmatprep.subr.mxu0 0.0
  %201 = vmatpush1.msra.mxu0 0.0
  %202 = vmatprep.subr.mxu0 0.0
  %203 = vmatpush1.msra.mxu0 0.0
  %204 = vmatprep.subr.mxu0 0.0
  %205 = vmatpush1.msra.mxu0 0.0
  %206 = vmatprep.subr.mxu0 0.0
  %207 = vmatpush1.msra.mxu0 0.0
  %208 = vmatprep.subr.mxu0 0.0
  %209 = vmatpush1.msra.mxu0 0.0
  %210 = vmatprep.subr.mxu0 0.0
  %211 = vmatpush1.msra.mxu0 0.0
  %212 = vmatprep.subr.mxu0 0.0
  %213 = vmatpush1.msra.mxu0 0.0
  %214 = vmatprep.subr.mxu0 0.0
  %215 = vmatpush1.msra.mxu0 0.0
  %216 = vmatprep.subr.mxu0 0.0
  %217 = vmatpush1.msra.mxu0 0.0
  %218 = vmatprep.subr.mxu0 0.0
  %219 = vmatpush1.msra.mxu0 %v188
  %220 = vmatprep.subr.mxu0 0.0
  %221 = vmatpush1.msra.mxu0 %v187
  %222 = vmatprep.subr.mxu0 0.0
  %223 = vmatpush1.msra.mxu0 %v186
  %224 = vmatprep.subr.mxu0 0.0
  %225 = vmatpush1.msra.mxu0 %v185
  %226 = vmatprep.subr.mxu0 0.0
  %227 = vmatpush2.msra.mxu0 0.0
  %228 = vmatprep.subr.mxu0 0.0
  %229 = vmatpush2.msra.mxu0 0.0
  %230 = vmatprep.subr.mxu0 0.0
  %231 = vmatpush2.msra.mxu0 0.0
  %232 = vmatprep.subr.mxu0 0.0
  %233 = vmatpush2.msra.mxu0 0.0
  %234 = vmatprep.subr.mxu0 0.0
  %235 = vmatpush2.msra.mxu0 0.0
  %236 = vmatprep.subr.mxu0 0.0
  %237 = vmatpush2.msra.mxu0 0.0
  %238 = vmatprep.subr.mxu0 0.0
  %239 = vmatpush2.msra.mxu0 0.0
  %240 = vmatprep.subr.mxu0 0.0
  %241 = vmatpush2.msra.mxu0 0.0
  %242 = vmatprep.subr.mxu0 0.0
  %243 = vmatpush2.msra.mxu0 0.0
  %244 = vmatprep.subr.mxu0 0.0
  %245 = vmatpush2.msra.mxu0 0.0
  %246 = vmatprep.subr.mxu0 0.0
  %247 = vmatpush2.msra.mxu0 0.0
  %248 = vmatprep.subr.mxu0 0.0
  %249 = vmatpush2.msra.mxu0 0.0
  %250 = vmatprep.subr.mxu0 0.0
  %251 = vmatpush2.msra.mxu0 0.0
  %252 = vmatprep.subr.mxu0 0.0
  %253 = vmatpush2.msra.mxu0 0.0
  %254 = vmatprep.subr.mxu0 0.0
  %255 = vmatpush2.msra.mxu0 0.0
  %256 = vmatprep.subr.mxu0 0.0
  %257 = vmatpush2.msra.mxu0 0.0
  %258 = vmatprep.mubr.f32.mxu0 0.0
  %259 = vmatmul.mubr.f32.gmra.mxu0 %v192
  %v260 = vpop.f32.mrf.mxu0
  %v261 = vadd.f32 0.0, %v260
  %v262 = vpop.f32.mrf.mxu0
  %263 = vdwg.mxu0
  %v264 = vadd.f32 %v190, %v261
  %v265 = vtanh.pop %v264
  %266 = vst.msk [vmem:[#allocation3] sm:$0xff] %vm47, %v265
  %s267 = scalar_lea.vmem [#allocation2], 8
  %v268 = vld [vmem:[%s267] sm:$0xff]
  %v270 = vsel %vm47, %v265, 0
  %272 = vmatprep.subr.mxu0 0.0
  %273 = vmatpush1.msra.mxu0 0.0
  %274 = vmatprep.subr.mxu0 0.0
  %275 = vmatpush1.msra.mxu0 0.0
  %276 = vmatprep.subr.mxu0 0.0
  %277 = vmatpush1.msra.mxu0 0.0
  %278 = vmatprep.subr.mxu0 0.0
  %279 = vmatpush1.msra.mxu0 0.0
  %280 = vmatprep.subr.mxu0 0.0
  %281 = vmatpush1.msra.mxu0 0.0
  %282 = vmatprep.subr.mxu0 0.0
  %283 = vmatpush1.msra.mxu0 0.0
  %284 = vmatprep.subr.mxu0 0.0
  %285 = vmatpush1.msra.mxu0 0.0
  %286 = vmatprep.subr.mxu0 0.0
  %287 = vmatpush1.msra.mxu0 0.0
  %288 = vmatprep.subr.mxu0 0.0
  %289 = vmatpush1.msra.mxu0 0.0
  %290 = vmatprep.subr.mxu0 0.0
  %291 = vmatpush1.msra.mxu0 0.0
  %292 = vmatprep.subr.mxu0 0.0
  %293 = vmatpush1.msra.mxu0 0.0
  %294 = vmatprep.subr.mxu0 0.0
  %295 = vmatpush1.msra.mxu0 0.0
  %296 = vmatprep.subr.mxu0 0.0
  %297 = vmatpush1.msra.mxu0 %v188
  %298 = vmatprep.subr.mxu0 0.0
  %299 = vmatpush1.msra.mxu0 %v187
  %300 = vmatprep.subr.mxu0 0.0
  %301 = vmatpush1.msra.mxu0 %v186
  %302 = vmatprep.subr.mxu0 0.0
  %303 = vmatpush1.msra.mxu0 %v185
  %304 = vmatprep.subr.mxu0 0.0
  %305 = vmatpush2.msra.mxu0 0.0
  %306 = vmatprep.subr.mxu0 0.0
  %307 = vmatpush2.msra.mxu0 0.0
  %308 = vmatprep.subr.mxu0 0.0
  %309 = vmatpush2.msra.mxu0 0.0
  %310 = vmatprep.subr.mxu0 0.0
  %311 = vmatpush2.msra.mxu0 0.0
  %312 = vmatprep.subr.mxu0 0.0
  %313 = vmatpush2.msra.mxu0 0.0
  %314 = vmatprep.subr.mxu0 0.0
  %315 = vmatpush2.msra.mxu0 0.0
  %316 = vmatprep.subr.mxu0 0.0
  %317 = vmatpush2.msra.mxu0 0.0
  %318 = vmatprep.subr.mxu0 0.0
  %319 = vmatpush2.msra.mxu0 0.0
  %320 = vmatprep.subr.mxu0 0.0
  %321 = vmatpush2.msra.mxu0 0.0
  %322 = vmatprep.subr.mxu0 0.0
  %323 = vmatpush2.msra.mxu0 0.0
  %324 = vmatprep.subr.mxu0 0.0
  %325 = vmatpush2.msra.mxu0 0.0
  %326 = vmatprep.subr.mxu0 0.0
  %327 = vmatpush2.msra.mxu0 0.0
  %328 = vmatprep.subr.mxu0 0.0
  %329 = vmatpush2.msra.mxu0 0.0
  %330 = vmatprep.subr.mxu0 0.0
  %331 = vmatpush2.msra.mxu0 0.0
  %332 = vmatprep.subr.mxu0 0.0
  %333 = vmatpush2.msra.mxu0 0.0
  %334 = vmatprep.subr.mxu0 0.0
  %335 = vmatpush2.msra.mxu0 0.0
  %336 = vmatprep.mubr.f32.mxu0 0.0
  %337 = vmatmul.mubr.f32.gmra.mxu0 %v270
  %v338 = vpop.f32.mrf.mxu0
  %v339 = vadd.f32 0.0, %v338
  %v340 = vpop.f32.mrf.mxu0
  %341 = vdwg.mxu0
  %v342 = vadd.f32 %v268, %v339
  %v343 = vtanh.pop %v342
  %s344 = scalar_lea.vmem [#allocation3], 8
  %345 = vst.msk [vmem:[%s344] sm:$0xff] %vm47, %v343
  %s346 = scalar_lea.vmem [#allocation2], 16
  %v347 = vld [vmem:[%s346] sm:$0xff]
  %v349 = vsel %vm47, %v343, 0
  %351 = vmatprep.subr.mxu0 0.0
  %352 = vmatpush1.msra.mxu0 0.0
  %353 = vmatprep.subr.mxu0 0.0
  %354 = vmatpush1.msra.mxu0 0.0
  %355 = vmatprep.subr.mxu0 0.0
  %356 = vmatpush1.msra.mxu0 0.0
  %357 = vmatprep.subr.mxu0 0.0
  %358 = vmatpush1.msra.mxu0 0.0
  %359 = vmatprep.subr.mxu0 0.0
  %360 = vmatpush1.msra.mxu0 0.0
  %361 = vmatprep.subr.mxu0 0.0
  %362 = vmatpush1.msra.mxu0 0.0
  %363 = vmatprep.subr.mxu0 0.0
  %364 = vmatpush1.msra.mxu0 0.0
  %365 = vmatprep.subr.mxu0 0.0
  %366 = vmatpush1.msra.mxu0 0.0
  %367 = vmatprep.subr.mxu0 0.0
  %368 = vmatpush1.msra.mxu0 0.0
  %369 = vmatprep.subr.mxu0 0.0
  %370 = vmatpush1.msra.mxu0 0.0
  %371 = vmatprep.subr.mxu0 0.0
  %372 = vmatpush1.msra.mxu0 0.0
  %373 = vmatprep.subr.mxu0 0.0
  %374 = vmatpush1.msra.mxu0 0.0
  %375 = vmatprep.subr.mxu0 0.0
  %376 = vmatpush1.msra.mxu0 %v188
  %377 = vmatprep.subr.mxu0 0.0
  %378 = vmatpush1.msra.mxu0 %v187
  %379 = vmatprep.subr.mxu0 0.0
  %380 = vmatpush1.msra.mxu0 %v186
  %381 = vmatprep.subr.mxu0 0.0
  %382 = vmatpush1.msra.mxu0 %v185
  %383 = vmatprep.subr.mxu0 0.0
  %384 = vmatpush2.msra.mxu0 0.0
  %385 = vmatprep.subr.mxu0 0.0
  %386 = vmatpush2.msra.mxu0 0.0
  %387 = vmatprep.subr.mxu0 0.0
  %388 = vmatpush2.msra.mxu0 0.0
  %389 = vmatprep.subr.mxu0 0.0
  %390 = vmatpush2.msra.mxu0 0.0
  %391 = vmatprep.subr.mxu0 0.0
  %392 = vmatpush2.msra.mxu0 0.0
  %393 = vmatprep.subr.mxu0 0.0
  %394 = vmatpush2.msra.mxu0 0.0
  %395 = vmatprep.subr.mxu0 0.0
  %396 = vmatpush2.msra.mxu0 0.0
  %397 = vmatprep.subr.mxu0 0.0
  %398 = vmatpush2.msra.mxu0 0.0
  %399 = vmatprep.subr.mxu0 0.0
  %400 = vmatpush2.msra.mxu0 0.0
  %401 = vmatprep.subr.mxu0 0.0
  %402 = vmatpush2.msra.mxu0 0.0
  %403 = vmatprep.subr.mxu0 0.0
  %404 = vmatpush2.msra.mxu0 0.0
  %405 = vmatprep.subr.mxu0 0.0
  %406 = vmatpush2.msra.mxu0 0.0
  %407 = vmatprep.subr.mxu0 0.0
  %408 = vmatpush2.msra.mxu0 0.0
  %409 = vmatprep.subr.mxu0 0.0
  %410 = vmatpush2.msra.mxu0 0.0
  %411 = vmatprep.subr.mxu0 0.0
  %412 = vmatpush2.msra.mxu0 0.0
  %413 = vmatprep.subr.mxu0 0.0
  %414 = vmatpush2.msra.mxu0 0.0
  %415 = vmatprep.mubr.f32.mxu0 0.0
  %416 = vmatmul.mubr.f32.gmra.mxu0 %v349
  %v417 = vpop.f32.mrf.mxu0
  %v418 = vadd.f32 0.0, %v417
  %v419 = vpop.f32.mrf.mxu0
  %420 = vdwg.mxu0
  %v421 = vadd.f32 %v347, %v418
  %v422 = vtanh.pop %v421
  %s423 = scalar_lea.vmem [#allocation3], 16
  %424 = vst.msk [vmem:[%s423] sm:$0xff] %vm47, %v422
  %s425 = scalar_lea.vmem [#allocation2], 24
  %v426 = vld [vmem:[%s425] sm:$0xff]
  %v428 = vsel %vm47, %v422, 0
  %430 = vmatprep.subr.mxu0 0.0
  %431 = vmatpush1.msra.mxu0 0.0
  %432 = vmatprep.subr.mxu0 0.0
  %433 = vmatpush1.msra.mxu0 0.0
  %434 = vmatprep.subr.mxu0 0.0
  %435 = vmatpush1.msra.mxu0 0.0
  %436 = vmatprep.subr.mxu0 0.0
  %437 = vmatpush1.msra.mxu0 0.0
  %438 = vmatprep.subr.mxu0 0.0
  %439 = vmatpush1.msra.mxu0 0.0
  %440 = vmatprep.subr.mxu0 0.0
  %441 = vmatpush1.msra.mxu0 0.0
  %442 = vmatprep.subr.mxu0 0.0
  %443 = vmatpush1.msra.mxu0 0.0
  %444 = vmatprep.subr.mxu0 0.0
  %445 = vmatpush1.msra.mxu0 0.0
  %446 = vmatprep.subr.mxu0 0.0
  %447 = vmatpush1.msra.mxu0 0.0
  %448 = vmatprep.subr.mxu0 0.0
  %449 = vmatpush1.msra.mxu0 0.0
  %450 = vmatprep.subr.mxu0 0.0
  %451 = vmatpush1.msra.mxu0 0.0
  %452 = vmatprep.subr.mxu0 0.0
  %453 = vmatpush1.msra.mxu0 0.0
  %454 = vmatprep.subr.mxu0 0.0
  %455 = vmatpush1.msra.mxu0 %v188
  %456 = vmatprep.subr.mxu0 0.0
  %457 = vmatpush1.msra.mxu0 %v187
  %458 = vmatprep.subr.mxu0 0.0
  %459 = vmatpush1.msra.mxu0 %v186
  %460 = vmatprep.subr.mxu0 0.0
  %461 = vmatpush1.msra.mxu0 %v185
  %462 = vmatprep.subr.mxu0 0.0
  %463 = vmatpush2.msra.mxu0 0.0
  %464 = vmatprep.subr.mxu0 0.0
  %465 = vmatpush2.msra.mxu0 0.0
  %466 = vmatprep.subr.mxu0 0.0
  %467 = vmatpush2.msra.mxu0 0.0
  %468 = vmatprep.subr.mxu0 0.0
  %469 = vmatpush2.msra.mxu0 0.0
  %470 = vmatprep.subr.mxu0 0.0
  %471 = vmatpush2.msra.mxu0 0.0
  %472 = vmatprep.subr.mxu0 0.0
  %473 = vmatpush2.msra.mxu0 0.0
  %474 = vmatprep.subr.mxu0 0.0
  %475 = vmatpush2.msra.mxu0 0.0
  %476 = vmatprep.subr.mxu0 0.0
  %477 = vmatpush2.msra.mxu0 0.0
  %478 = vmatprep.subr.mxu0 0.0
  %479 = vmatpush2.msra.mxu0 0.0
  %480 = vmatprep.subr.mxu0 0.0
  %481 = vmatpush2.msra.mxu0 0.0
  %482 = vmatprep.subr.mxu0 0.0
  %483 = vmatpush2.msra.mxu0 0.0
  %484 = vmatprep.subr.mxu0 0.0
  %485 = vmatpush2.msra.mxu0 0.0
  %486 = vmatprep.subr.mxu0 0.0
  %487 = vmatpush2.msra.mxu0 0.0
  %488 = vmatprep.subr.mxu0 0.0
  %489 = vmatpush2.msra.mxu0 0.0
  %490 = vmatprep.subr.mxu0 0.0
  %491 = vmatpush2.msra.mxu0 0.0
  %492 = vmatprep.subr.mxu0 0.0
  %493 = vmatpush2.msra.mxu0 0.0
  %494 = vmatprep.mubr.f32.mxu0 0.0
  %495 = vmatmul.mubr.f32.gmra.mxu0 %v428
  %v496 = vpop.f32.mrf.mxu0
  %v497 = vadd.f32 0.0, %v496
  %v498 = vpop.f32.mrf.mxu0
  %499 = vdwg.mxu0
  %v500 = vadd.f32 %v426, %v497
  %v501 = vtanh.pop %v500
  %s502 = scalar_lea.vmem [#allocation3], 24
  %503 = vst.msk [vmem:[%s502] sm:$0xff] %vm47, %v501
  %s504 = scalar_lea.vmem [#allocation2], 32
  %v505 = vld [vmem:[%s504] sm:$0xff]
  %v507 = vsel %vm47, %v501, 0
  %509 = vmatprep.subr.mxu0 0.0
  %510 = vmatpush1.msra.mxu0 0.0
  %511 = vmatprep.subr.mxu0 0.0
  %512 = vmatpush1.msra.mxu0 0.0
  %513 = vmatprep.subr.mxu0 0.0
  %514 = vmatpush1.msra.mxu0 0.0
  %515 = vmatprep.subr.mxu0 0.0
  %516 = vmatpush1.msra.mxu0 0.0
  %517 = vmatprep.subr.mxu0 0.0
  %518 = vmatpush1.msra.mxu0 0.0
  %519 = vmatprep.subr.mxu0 0.0
  %520 = vmatpush1.msra.mxu0 0.0
  %521 = vmatprep.subr.mxu0 0.0
  %522 = vmatpush1.msra.mxu0 0.0
  %523 = vmatprep.subr.mxu0 0.0
  %524 = vmatpush1.msra.mxu0 0.0
  %525 = vmatprep.subr.mxu0 0.0
  %526 = vmatpush1.msra.mxu0 0.0
  %527 = vmatprep.subr.mxu0 0.0
  %528 = vmatpush1.msra.mxu0 0.0
  %529 = vmatprep.subr.mxu0 0.0
  %530 = vmatpush1.msra.mxu0 0.0
  %531 = vmatprep.subr.mxu0 0.0
  %532 = vmatpush1.msra.mxu0 0.0
  %533 = vmatprep.subr.mxu0 0.0
  %534 = vmatpush1.msra.mxu0 %v188
  %535 = vmatprep.subr.mxu0 0.0
  %536 = vmatpush1.msra.mxu0 %v187
  %537 = vmatprep.subr.mxu0 0.0
  %538 = vmatpush1.msra.mxu0 %v186
  %539 = vmatprep.subr.mxu0 0.0
  %540 = vmatpush1.msra.mxu0 %v185
  %541 = vmatprep.subr.mxu0 0.0
  %542 = vmatpush2.msra.mxu0 0.0
  %543 = vmatprep.subr.mxu0 0.0
  %544 = vmatpush2.msra.mxu0 0.0
  %545 = vmatprep.subr.mxu0 0.0
  %546 = vmatpush2.msra.mxu0 0.0
  %547 = vmatprep.subr.mxu0 0.0
  %548 = vmatpush2.msra.mxu0 0.0
  %549 = vmatprep.subr.mxu0 0.0
  %550 = vmatpush2.msra.mxu0 0.0
  %551 = vmatprep.subr.mxu0 0.0
  %552 = vmatpush2.msra.mxu0 0.0
  %553 = vmatprep.subr.mxu0 0.0
  %554 = vmatpush2.msra.mxu0 0.0
  %555 = vmatprep.subr.mxu0 0.0
  %556 = vmatpush2.msra.mxu0 0.0
  %557 = vmatprep.subr.mxu0 0.0
  %558 = vmatpush2.msra.mxu0 0.0
  %559 = vmatprep.subr.mxu0 0.0
  %560 = vmatpush2.msra.mxu0 0.0
  %561 = vmatprep.subr.mxu0 0.0
  %562 = vmatpush2.msra.mxu0 0.0
  %563 = vmatprep.subr.mxu0 0.0
  %564 = vmatpush2.msra.mxu0 0.0
  %565 = vmatprep.subr.mxu0 0.0
  %566 = vmatpush2.msra.mxu0 0.0
  %567 = vmatprep.subr.mxu0 0.0
  %568 = vmatpush2.msra.mxu0 0.0
  %569 = vmatprep.subr.mxu0 0.0
  %570 = vmatpush2.msra.mxu0 0.0
  %571 = vmatprep.subr.mxu0 0.0
  %572 = vmatpush2.msra.mxu0 0.0
  %573 = vmatprep.mubr.f32.mxu0 0.0
  %574 = vmatmul.mubr.f32.gmra.mxu0 %v507
  %v575 = vpop.f32.mrf.mxu0
  %v576 = vadd.f32 0.0, %v575
  %v577 = vpop.f32.mrf.mxu0
  %578 = vdwg.mxu0
  %v579 = vadd.f32 %v505, %v576
  %v580 = vtanh.pop %v579
  %s581 = scalar_lea.vmem [#allocation3], 32
  %582 = vst.msk [vmem:[%s581] sm:$0xff] %vm47, %v580
  %s583 = scalar_lea.vmem [#allocation2], 40
  %v584 = vld [vmem:[%s583] sm:$0xff]
  %v586 = vsel %vm47, %v580, 0
  %588 = vmatprep.subr.mxu0 0.0
  %589 = vmatpush1.msra.mxu0 0.0
  %590 = vmatprep.subr.mxu0 0.0
  %591 = vmatpush1.msra.mxu0 0.0
  %592 = vmatprep.subr.mxu0 0.0
  %593 = vmatpush1.msra.mxu0 0.0
  %594 = vmatprep.subr.mxu0 0.0
  %595 = vmatpush1.msra.mxu0 0.0
  %596 = vmatprep.subr.mxu0 0.0
  %597 = vmatpush1.msra.mxu0 0.0
  %598 = vmatprep.subr.mxu0 0.0
  %599 = vmatpush1.msra.mxu0 0.0
  %600 = vmatprep.subr.mxu0 0.0
  %601 = vmatpush1.msra.mxu0 0.0
  %602 = vmatprep.subr.mxu0 0.0
  %603 = vmatpush1.msra.mxu0 0.0
  %604 = vmatprep.subr.mxu0 0.0
  %605 = vmatpush1.msra.mxu0 0.0
  %606 = vmatprep.subr.mxu0 0.0
  %607 = vmatpush1.msra.mxu0 0.0
  %608 = vmatprep.subr.mxu0 0.0
  %609 = vmatpush1.msra.mxu0 0.0
  %610 = vmatprep.subr.mxu0 0.0
  %611 = vmatpush1.msra.mxu0 0.0
  %612 = vmatprep.subr.mxu0 0.0
  %613 = vmatpush1.msra.mxu0 %v188
  %614 = vmatprep.subr.mxu0 0.0
  %615 = vmatpush1.msra.mxu0 %v187
  %616 = vmatprep.subr.mxu0 0.0
  %617 = vmatpush1.msra.mxu0 %v186
  %618 = vmatprep.subr.mxu0 0.0
  %619 = vmatpush1.msra.mxu0 %v185
  %620 = vmatprep.subr.mxu0 0.0
  %621 = vmatpush2.msra.mxu0 0.0
  %622 = vmatprep.subr.mxu0 0.0
  %623 = vmatpush2.msra.mxu0 0.0
  %624 = vmatprep.subr.mxu0 0.0
  %625 = vmatpush2.msra.mxu0 0.0
  %626 = vmatprep.subr.mxu0 0.0
  %627 = vmatpush2.msra.mxu0 0.0
  %628 = vmatprep.subr.mxu0 0.0
  %629 = vmatpush2.msra.mxu0 0.0
  %630 = vmatprep.subr.mxu0 0.0
  %631 = vmatpush2.msra.mxu0 0.0
  %632 = vmatprep.subr.mxu0 0.0
  %633 = vmatpush2.msra.mxu0 0.0
  %634 = vmatprep.subr.mxu0 0.0
  %635 = vmatpush2.msra.mxu0 0.0
  %636 = vmatprep.subr.mxu0 0.0
  %637 = vmatpush2.msra.mxu0 0.0
  %638 = vmatprep.subr.mxu0 0.0
  %639 = vmatpush2.msra.mxu0 0.0
  %640 = vmatprep.subr.mxu0 0.0
  %641 = vmatpush2.msra.mxu0 0.0
  %642 = vmatprep.subr.mxu0 0.0
  %643 = vmatpush2.msra.mxu0 0.0
  %644 = vmatprep.subr.mxu0 0.0
  %645 = vmatpush2.msra.mxu0 0.0
  %646 = vmatprep.subr.mxu0 0.0
  %647 = vmatpush2.msra.mxu0 0.0
  %648 = vmatprep.subr.mxu0 0.0
  %649 = vmatpush2.msra.mxu0 0.0
  %650 = vmatprep.subr.mxu0 0.0
  %651 = vmatpush2.msra.mxu0 0.0
  %652 = vmatprep.mubr.f32.mxu0 0.0
  %653 = vmatmul.mubr.f32.gmra.mxu0 %v586
  %v654 = vpop.f32.mrf.mxu0
  %v655 = vadd.f32 0.0, %v654
  %v656 = vpop.f32.mrf.mxu0
  %657 = vdwg.mxu0
  %v658 = vadd.f32 %v584, %v655
  %v659 = vtanh.pop %v658
  %s660 = scalar_lea.vmem [#allocation3], 40
  %661 = vst.msk [vmem:[%s660] sm:$0xff] %vm47, %v659
  %s662 = scalar_lea.vmem [#allocation2], 48
  %v663 = vld [vmem:[%s662] sm:$0xff]
  %v665 = vsel %vm47, %v659, 0
  %667 = vmatprep.subr.mxu0 0.0
  %668 = vmatpush1.msra.mxu0 0.0
  %669 = vmatprep.subr.mxu0 0.0
  %670 = vmatpush1.msra.mxu0 0.0
  %671 = vmatprep.subr.mxu0 0.0
  %672 = vmatpush1.msra.mxu0 0.0
  %673 = vmatprep.subr.mxu0 0.0
  %674 = vmatpush1.msra.mxu0 0.0
  %675 = vmatprep.subr.mxu0 0.0
  %676 = vmatpush1.msra.mxu0 0.0
  %677 = vmatprep.subr.mxu0 0.0
  %678 = vmatpush1.msra.mxu0 0.0
  %679 = vmatprep.subr.mxu0 0.0
  %680 = vmatpush1.msra.mxu0 0.0
  %681 = vmatprep.subr.mxu0 0.0
  %682 = vmatpush1.msra.mxu0 0.0
  %683 = vmatprep.subr.mxu0 0.0
  %684 = vmatpush1.msra.mxu0 0.0
  %685 = vmatprep.subr.mxu0 0.0
  %686 = vmatpush1.msra.mxu0 0.0
  %687 = vmatprep.subr.mxu0 0.0
  %688 = vmatpush1.msra.mxu0 0.0
  %689 = vmatprep.subr.mxu0 0.0
  %690 = vmatpush1.msra.mxu0 0.0
  %691 = vmatprep.subr.mxu0 0.0
  %692 = vmatpush1.msra.mxu0 %v188
  %693 = vmatprep.subr.mxu0 0.0
  %694 = vmatpush1.msra.mxu0 %v187
  %695 = vmatprep.subr.mxu0 0.0
  %696 = vmatpush1.msra.mxu0 %v186
  %697 = vmatprep.subr.mxu0 0.0
  %698 = vmatpush1.msra.mxu0 %v185
  %699 = vmatprep.subr.mxu0 0.0
  %700 = vmatpush2.msra.mxu0 0.0
  %701 = vmatprep.subr.mxu0 0.0
  %702 = vmatpush2.msra.mxu0 0.0
  %703 = vmatprep.subr.mxu0 0.0
  %704 = vmatpush2.msra.mxu0 0.0
  %705 = vmatprep.subr.mxu0 0.0
  %706 = vmatpush2.msra.mxu0 0.0
  %707 = vmatprep.subr.mxu0 0.0
  %708 = vmatpush2.msra.mxu0 0.0
  %709 = vmatprep.subr.mxu0 0.0
  %710 = vmatpush2.msra.mxu0 0.0
  %711 = vmatprep.subr.mxu0 0.0
  %712 = vmatpush2.msra.mxu0 0.0
  %713 = vmatprep.subr.mxu0 0.0
  %714 = vmatpush2.msra.mxu0 0.0
  %715 = vmatprep.subr.mxu0 0.0
  %716 = vmatpush2.msra.mxu0 0.0
  %717 = vmatprep.subr.mxu0 0.0
  %718 = vmatpush2.msra.mxu0 0.0
  %719 = vmatprep.subr.mxu0 0.0
  %720 = vmatpush2.msra.mxu0 0.0
  %721 = vmatprep.subr.mxu0 0.0
  %722 = vmatpush2.msra.mxu0 0.0
  %723 = vmatprep.subr.mxu0 0.0
  %724 = vmatpush2.msra.mxu0 0.0
  %725 = vmatprep.subr.mxu0 0.0
  %726 = vmatpush2.msra.mxu0 0.0
  %727 = vmatprep.subr.mxu0 0.0
  %728 = vmatpush2.msra.mxu0 0.0
  %729 = vmatprep.subr.mxu0 0.0
  %730 = vmatpush2.msra.mxu0 0.0
  %731 = vmatprep.mubr.f32.mxu0 0.0
  %732 = vmatmul.mubr.f32.gmra.mxu0 %v665
  %v733 = vpop.f32.mrf.mxu0
  %v734 = vadd.f32 0.0, %v733
  %v735 = vpop.f32.mrf.mxu0
  %736 = vdwg.mxu0
  %v737 = vadd.f32 %v663, %v734
  %v738 = vtanh.pop %v737
  %s739 = scalar_lea.vmem [#allocation3], 48
  %740 = vst.msk [vmem:[%s739] sm:$0xff] %vm47, %v738
  %s741 = scalar_lea.vmem [#allocation2], 56
  %v742 = vld [vmem:[%s741] sm:$0xff]
  %v744 = vsel %vm47, %v738, 0
  %746 = vmatprep.subr.mxu0 0.0
  %747 = vmatpush1.msra.mxu0 0.0
  %748 = vmatprep.subr.mxu0 0.0
  %749 = vmatpush1.msra.mxu0 0.0
  %750 = vmatprep.subr.mxu0 0.0
  %751 = vmatpush1.msra.mxu0 0.0
  %752 = vmatprep.subr.mxu0 0.0
  %753 = vmatpush1.msra.mxu0 0.0
  %754 = vmatprep.subr.mxu0 0.0
  %755 = vmatpush1.msra.mxu0 0.0
  %756 = vmatprep.subr.mxu0 0.0
  %757 = vmatpush1.msra.mxu0 0.0
  %758 = vmatprep.subr.mxu0 0.0
  %759 = vmatpush1.msra.mxu0 0.0
  %760 = vmatprep.subr.mxu0 0.0
  %761 = vmatpush1.msra.mxu0 0.0
  %762 = vmatprep.subr.mxu0 0.0
  %763 = vmatpush1.msra.mxu0 0.0
  %764 = vmatprep.subr.mxu0 0.0
  %765 = vmatpush1.msra.mxu0 0.0
  %766 = vmatprep.subr.mxu0 0.0
  %767 = vmatpush1.msra.mxu0 0.0
  %768 = vmatprep.subr.mxu0 0.0
  %769 = vmatpush1.msra.mxu0 0.0
  %770 = vmatprep.subr.mxu0 0.0
  %771 = vmatpush1.msra.mxu0 %v188
  %772 = vmatprep.subr.mxu0 0.0
  %773 = vmatpush1.msra.mxu0 %v187
  %774 = vmatprep.subr.mxu0 0.0
  %775 = vmatpush1.msra.mxu0 %v186
  %776 = vmatprep.subr.mxu0 0.0
  %777 = vmatpush1.msra.mxu0 %v185
  %778 = vmatprep.subr.mxu0 0.0
  %779 = vmatpush2.msra.mxu0 0.0
  %780 = vmatprep.subr.mxu0 0.0
  %781 = vmatpush2.msra.mxu0 0.0
  %782 = vmatprep.subr.mxu0 0.0
  %783 = vmatpush2.msra.mxu0 0.0
  %784 = vmatprep.subr.mxu0 0.0
  %785 = vmatpush2.msra.mxu0 0.0
  %786 = vmatprep.subr.mxu0 0.0
  %787 = vmatpush2.msra.mxu0 0.0
  %788 = vmatprep.subr.mxu0 0.0
  %789 = vmatpush2.msra.mxu0 0.0
  %790 = vmatprep.subr.mxu0 0.0
  %791 = vmatpush2.msra.mxu0 0.0
  %792 = vmatprep.subr.mxu0 0.0
  %793 = vmatpush2.msra.mxu0 0.0
  %794 = vmatprep.subr.mxu0 0.0
  %795 = vmatpush2.msra.mxu0 0.0
  %796 = vmatprep.subr.mxu0 0.0
  %797 = vmatpush2.msra.mxu0 0.0
  %798 = vmatprep.subr.mxu0 0.0
  %799 = vmatpush2.msra.mxu0 0.0
  %800 = vmatprep.subr.mxu0 0.0
  %801 = vmatpush2.msra.mxu0 0.0
  %802 = vmatprep.subr.mxu0 0.0
  %803 = vmatpush2.msra.mxu0 0.0
  %804 = vmatprep.subr.mxu0 0.0
  %805 = vmatpush2.msra.mxu0 0.0
  %806 = vmatprep.subr.mxu0 0.0
  %807 = vmatpush2.msra.mxu0 0.0
  %808 = vmatprep.subr.mxu0 0.0
  %809 = vmatpush2.msra.mxu0 0.0
  %810 = vmatprep.mubr.f32.mxu0 0.0
  %811 = vmatmul.mubr.f32.gmra.mxu0 %v744
  %v812 = vpop.f32.mrf.mxu0
  %v813 = vadd.f32 0.0, %v812
  %v814 = vpop.f32.mrf.mxu0
  %815 = vdwg.mxu0
  %v816 = vadd.f32 %v742, %v813
  %v817 = vtanh.pop %v816
  %s818 = scalar_lea.vmem [#allocation3], 56
  %819 = vst.msk [vmem:[%s818] sm:$0xff] %vm47, %v817
  %820 = vst.msk [vmem:[%s8] sm:$0xff] %vm47, %v817
  %v821 = vld [vmem:[#allocation3] sm:$0xff]
  %v822 = vld [vmem:[#allocation3 + $0x8] sm:$0xff]
  %v823 = vld [vmem:[#allocation3 + $0x10] sm:$0xff]
  %v824 = vld [vmem:[#allocation3 + $0x18] sm:$0xff]
  %v825 = vld [vmem:[#allocation3 + $0x20] sm:$0xff]
  %v826 = vld [vmem:[#allocation3 + $0x28] sm:$0xff]
  %v827 = vld [vmem:[#allocation3 + $0x30] sm:$0xff]
  %v828 = vld [vmem:[#allocation3 + $0x38] sm:$0xff]
  %v829 = vld [vmem:[%s5] sm:$0xff]
  %v830 = vld [vmem:[%s5 + $0x8] sm:$0xff]
  %v831 = vld [vmem:[%s5 + $0x10] sm:$0xff]
  %v832 = vld [vmem:[%s5 + $0x18] sm:$0xff]
  %v833 = vld [vmem:[%s6] sm:$0x1]
  %v835 = vlaneseq
  %v836 = vshrl.u32 %v835, 7
  %v837 = vsub.s32 0, %v836
  %v838 = vrot.slane %v833, %v837
  %v841 = vsel %vm47, %v821, 0
  %v844 = vsel %vm47, %v822, 0
  %v847 = vsel %vm47, %v823, 0
  %v850 = vsel %vm47, %v824, 0
  %v853 = vsel %vm47, %v825, 0
  %v856 = vsel %vm47, %v826, 0
  %v859 = vsel %vm47, %v827, 0
  %v862 = vsel %vm47, %v828, 0
  %864 = vmatprep.subr.mxu0 0.0
  %865 = vmatpush1.msra.mxu0 0.0
  %866 = vmatprep.subr.mxu0 0.0
  %867 = vmatpush1.msra.mxu0 0.0
  %868 = vmatprep.subr.mxu0 0.0
  %869 = vmatpush1.msra.mxu0 0.0
  %870 = vmatprep.subr.mxu0 0.0
  %871 = vmatpush1.msra.mxu0 0.0
  %872 = vmatprep.subr.mxu0 0.0
  %873 = vmatpush1.msra.mxu0 0.0
  %874 = vmatprep.subr.mxu0 0.0
  %875 = vmatpush1.msra.mxu0 0.0
  %876 = vmatprep.subr.mxu0 0.0
  %877 = vmatpush1.msra.mxu0 0.0
  %878 = vmatprep.subr.mxu0 0.0
  %879 = vmatpush1.msra.mxu0 0.0
  %880 = vmatprep.subr.mxu0 0.0
  %881 = vmatpush1.msra.mxu0 0.0
  %882 = vmatprep.subr.mxu0 0.0
  %883 = vmatpush1.msra.mxu0 0.0
  %884 = vmatprep.subr.mxu0 0.0
  %885 = vmatpush1.msra.mxu0 0.0
  %886 = vmatprep.subr.mxu0 0.0
  %887 = vmatpush1.msra.mxu0 0.0
  %888 = vmatprep.subr.mxu0 0.0
  %889 = vmatpush1.msra.mxu0 %v832
  %890 = vmatprep.subr.mxu0 0.0
  %891 = vmatpush1.msra.mxu0 %v831
  %892 = vmatprep.subr.mxu0 0.0
  %893 = vmatpush1.msra.mxu0 %v830
  %894 = vmatprep.subr.mxu0 0.0
  %895 = vmatpush1.msra.mxu0 %v829
  %896 = vmatprep.subr.mxu0 0.0
  %897 = vmatpush2.msra.mxu0 0.0
  %898 = vmatprep.subr.mxu0 0.0
  %899 = vmatpush2.msra.mxu0 0.0
  %900 = vmatprep.subr.mxu0 0.0
  %901 = vmatpush2.msra.mxu0 0.0
  %902 = vmatprep.subr.mxu0 0.0
  %903 = vmatpush2.msra.mxu0 0.0
  %904 = vmatprep.subr.mxu0 0.0
  %905 = vmatpush2.msra.mxu0 0.0
  %906 = vmatprep.subr.mxu0 0.0
  %907 = vmatpush2.msra.mxu0 0.0
  %908 = vmatprep.subr.mxu0 0.0
  %909 = vmatpush2.msra.mxu0 0.0
  %910 = vmatprep.subr.mxu0 0.0
  %911 = vmatpush2.msra.mxu0 0.0
  %912 = vmatprep.subr.mxu0 0.0
  %913 = vmatpush2.msra.mxu0 0.0
  %914 = vmatprep.subr.mxu0 0.0
  %915 = vmatpush2.msra.mxu0 0.0
  %916 = vmatprep.subr.mxu0 0.0
  %917 = vmatpush2.msra.mxu0 0.0
  %918 = vmatprep.subr.mxu0 0.0
  %919 = vmatpush2.msra.mxu0 0.0
  %920 = vmatprep.subr.mxu0 0.0
  %921 = vmatpush2.msra.mxu0 0.0
  %922 = vmatprep.subr.mxu0 0.0
  %923 = vmatpush2.msra.mxu0 0.0
  %924 = vmatprep.subr.mxu0 0.0
  %925 = vmatpush2.msra.mxu0 0.0
  %926 = vmatprep.subr.mxu0 0.0
  %927 = vmatpush2.msra.mxu0 0.0
  %928 = vmatprep.mubr.f32.mxu0 0.0
  %929 = vmatmul.mubr.f32.gmra.mxu0 %v841
  %v930 = vpop.f32.mrf.mxu0
  %v931 = vadd.f32 %v838, %v930
  %v932 = vpop.f32.mrf.mxu0
  %933 = vmatprep.mubr.f32.mxu0 0.0
  %934 = vmatmul.mubr.f32.gmra.mxu0 %v844
  %v935 = vpop.f32.mrf.mxu0
  %v936 = vadd.f32 %v838, %v935
  %v937 = vpop.f32.mrf.mxu0
  %938 = vmatprep.mubr.f32.mxu0 0.0
  %939 = vmatmul.mubr.f32.gmra.mxu0 %v847
  %v940 = vpop.f32.mrf.mxu0
  %v941 = vadd.f32 %v838, %v940
  %v942 = vpop.f32.mrf.mxu0
  %943 = vmatprep.mubr.f32.mxu0 0.0
  %944 = vmatmul.mubr.f32.gmra.mxu0 %v850
  %v945 = vpop.f32.mrf.mxu0
  %v946 = vadd.f32 %v838, %v945
  %v947 = vpop.f32.mrf.mxu0
  %948 = vmatprep.mubr.f32.mxu0 0.0
  %949 = vmatmul.mubr.f32.gmra.mxu0 %v853
  %v950 = vpop.f32.mrf.mxu0
  %v951 = vadd.f32 %v838, %v950
  %v952 = vpop.f32.mrf.mxu0
  %953 = vmatprep.mubr.f32.mxu0 0.0
  %954 = vmatmul.mubr.f32.gmra.mxu0 %v856
  %v955 = vpop.f32.mrf.mxu0
  %v956 = vadd.f32 %v838, %v955
  %v957 = vpop.f32.mrf.mxu0
  %958 = vmatprep.mubr.f32.mxu0 0.0
  %959 = vmatmul.mubr.f32.gmra.mxu0 %v859
  %v960 = vpop.f32.mrf.mxu0
  %v961 = vadd.f32 %v838, %v960
  %v962 = vpop.f32.mrf.mxu0
  %963 = vmatprep.mubr.f32.mxu0 0.0
  %964 = vmatmul.mubr.f32.gmra.mxu0 %v862
  %v965 = vpop.f32.mrf.mxu0
  %v966 = vadd.f32 %v838, %v965
  %v967 = vpop.f32.mrf.mxu0
  %968 = vdwg.mxu0
  %vm969 = vcmask 130048
  %970 = vst.msk [vmem:[%s7] sm:$0xff] %vm969, %v931
  %971 = vst.msk [vmem:[%s7 + $0x8] sm:$0xff] %vm969, %v936
  %972 = vst.msk [vmem:[%s7 + $0x10] sm:$0xff] %vm969, %v941
  %973 = vst.msk [vmem:[%s7 + $0x18] sm:$0xff] %vm969, %v946
  %974 = vst.msk [vmem:[%s7 + $0x20] sm:$0xff] %vm969, %v951
  %975 = vst.msk [vmem:[%s7 + $0x28] sm:$0xff] %vm969, %v956
  %976 = vst.msk [vmem:[%s7 + $0x30] sm:$0xff] %vm969, %v961
  %977 = vst.msk [vmem:[%s7 + $0x38] sm:$0xff] %vm969, %v966
  // Predicated region
  $region30: #{char_rnn_forward.1} parent=0 // pred_check
    _
  $region31: #{char_rnn_forward.1} parent=0 // pred_check_branch
    %979 = sbr.rel (0) target = $region33
  $region32: #{char_rnn_forward.1} parent=0 // pred_region
    _
  $region33: #{char_rnn_forward.1} parent=0 // pred_fallthru
    _
  // Predicated region
  $region34: #{char_rnn_forward.1} parent=0 // pred_check
    _
  $region35: #{char_rnn_forward.1} parent=0 // pred_check_branch
    %981 = sbr.rel (0) target = $region37
  $region36: #{char_rnn_forward.1} parent=0 // pred_region
    _
  $region37: #{char_rnn_forward.1} parent=0 // pred_fallthru
    _
  // Predicated region
  $region38: #{char_rnn_forward.1} parent=0 // pred_check
    _
  $region39: #{char_rnn_forward.1} parent=0 // pred_check_branch
    %983 = sbr.rel (0) target = $region41
  $region40: #{char_rnn_forward.1} parent=0 // pred_region
    _
  $region41: #{char_rnn_forward.1} parent=0 // pred_fallthru
    _
  // Predicated region
  $region42: #{char_rnn_forward.1} parent=0 // pred_check
    _
  $region43: #{char_rnn_forward.1} parent=0 // pred_check_branch
    %985 = sbr.rel (0) target = $region45
  $region44: #{char_rnn_forward.1} parent=0 // pred_region
    _
  $region45: #{char_rnn_forward.1} parent=0 // pred_fallthru
    _

</llo_original>
